<compile_context>
chip_gen: v6e
topology: v6e:2x2x1
jax: 0.10.0
libtpu: 0.0.40
codegen_flags: <defaults>
</compile_context>

<pallas_src>
import jax
import jax.numpy as jnp
from jax.experimental import pallas as pl
from jax.experimental.pallas import tpu as pltpu


def _dma_copy_kernel(x_ref, o_ref, sem):
    # Single HBM->HBM DMA; no VMEM staging, no per-tile overhead.
    cp = pltpu.make_async_copy(x_ref, o_ref, sem)
    cp.start()
    cp.wait()


def _materialized_copy(x):
    """Full-tensor identity copy via one HBM->HBM DMA (shape-agnostic)."""
    return pl.pallas_call(
        _dma_copy_kernel,
        out_shape=jax.ShapeDtypeStruct(x.shape, x.dtype),
        in_specs=[pl.BlockSpec(memory_space=pl.ANY)],
        out_specs=pl.BlockSpec(memory_space=pl.ANY),
        scratch_shapes=[pltpu.SemaphoreType.DMA(())],
    )(x)


def hook_point_forward(x, *, materialize=False):
    """Pallas implementation of HookPoint.forward.

    Default (fast) path: HookPoint is a pure pass-through, so return x
    unchanged — no kernel, no HBM traffic.  With materialize=True, perform a
    single HBM->HBM DMA copy (useful when a distinct materialized copy of the
    activation buffer is desired, e.g. for activation caching).
    """
    # TODO(synk): fwd/bwd hook registration is host-side Python bookkeeping
    # with no Pallas equivalent; only the forward pass (identity) is lowered.
    if not materialize:
        return x

    # Guard degenerate inputs (0-d scalars, size-0 tensors): nothing to copy.
    if x.ndim == 0 or x.size == 0:
        return x

    return _materialized_copy(x)


if __name__ == "__main__":
    key = jax.random.PRNGKey(0)
    k1, k2 = jax.random.split(key)

    # Shapes consistent with a transformer hook point: [batch, seq, hidden].
    x = jax.random.normal(k1, (2, 8, 32), dtype=jnp.float32)
    x_odd = jax.random.normal(k2, (3, 5, 7), dtype=jnp.float32)  # odd total

    # Fast path (the real HookPoint semantics): pure pass-through.
    y_fast = hook_point_forward(x)
    jax.block_until_ready(y_fast)
    assert y_fast.shape == x.shape and y_fast.dtype == x.dtype
    assert bool(jnp.all(y_fast == x)), "fast path did not return input unchanged"

    # Materialize path: single HBM->HBM DMA copy.
    y = hook_point_forward(x, materialize=True)
    jax.block_until_ready(y)
    assert y.shape == x.shape, f"shape mismatch: {y.shape} vs {x.shape}"
    assert y.dtype == x.dtype, f"dtype mismatch: {y.dtype} vs {x.dtype}"
    assert bool(jnp.all(y == x)), "identity DMA copy did not match input"

    # Materialize path with an awkward (non-128-multiple) shape — the raw DMA
    # is shape-agnostic, so no padding/slicing is needed.
    y_odd = hook_point_forward(x_odd, materialize=True)
    jax.block_until_ready(y_odd)
    assert y_odd.shape == x_odd.shape and y_odd.dtype == x_odd.dtype
    assert bool(jnp.all(y_odd == x_odd)), "odd-shape identity DMA copy mismatch"

    # Empty-input guard.
    x_empty = jnp.zeros((0, 32), dtype=jnp.float32)
    y_empty = hook_point_forward(x_empty, materialize=True)
    jax.block_until_ready(y_empty)
    assert y_empty.shape == x_empty.shape and y_empty.dtype == x_empty.dtype

    print("KERNEL_OK")
</pallas_src>

<mosaic_0001>
module attributes {stable_mosaic.version = 11 : i64} {
  func.func @_dma_copy_kernel(%arg0: memref<2x8x32xf32, #tpu.memory_space<any>>, %arg1: memref<2x8x32xf32, #tpu.memory_space<any>>, %arg2: memref<!tpu.dma_semaphore, #tpu.memory_space<semaphore_mem>>) attributes {dimension_semantics = [], scalar_prefetch = 0 : i64, scratch_operands = 1 : i64, tpu.core_type = #tpu.core_type<tc>} {
    tpu.enqueue_dma source(%arg0 : memref<2x8x32xf32, #tpu.memory_space<any>>) target(%arg1 : memref<2x8x32xf32, #tpu.memory_space<any>>) target_semaphore(%arg2 : memref<!tpu.dma_semaphore, #tpu.memory_space<semaphore_mem>>)
    tpu.wait_dma2 semaphore(%arg2 : memref<!tpu.dma_semaphore, #tpu.memory_space<semaphore_mem>>) src(%arg0 : memref<2x8x32xf32, #tpu.memory_space<any>>) dst(%arg1 : memref<2x8x32xf32, #tpu.memory_space<any>>)
    return
  }
}

</mosaic_0001>

<llo_original>
// kernel: tpu_custom_call.1
$region0: #{tpu_custom_call.1}
  #allocation0 [shape = 'u32[]', space=smem, size = 0x4, offset = 0x4, fixed_abs, tag = 'smem constant byte address 0x4 - core index']
  #allocation1 [shape = 'u32[144,128]{1,0:T(1,128)}', space=vmem, size = 0x12000, scoped, tag = 'internal scratch']
  #allocation2 [shape = 's32[1]{0}', space=sflag, size = 0x4, scoped, tag = 'scratch operand']
  #allocation3 [shape = 's32[]', space=sflag, size = 0x4, offset = 0, fixed_abs, tag = 'sflag constant byte address 0x0 - dummy sync flag']
  #allocation4 [shape = 'u32[0]{0}', space=smem, size = 0, offset = 0, fixed_abs, tag = 'smem constant byte address 0x0 - null']
  %s0 = inlined_call_operand.hbm [shape: f32[2,8,32], index: 0, kind: input, shape index: {}]
  %s1 = inlined_call_operand.hbm [shape: f32[2,8,32], index: 1, kind: output, shape index: {}]
  %s2 = sld [smem:[#allocation0]]
  $region2: #{tpu_custom_call.1} parent=0
    _
  %s4 = ssub.s32 1, %s2
  %s5 = scalar_select 0, %s4, %s2
  %s7 = sshll.u32 1, 14
  %s8 = sxor.u32 4294967295, %s7
  %12 = dma.general %s0, 256, %s1, [#allocation2], 131072, [#allocation4], 0, 0
  %s13 = smul.u32 2, 8
  %s14 = smul.u32 %s13, 1
  %s15 = sshll.u32 %s14, 4
  %16 = dma.done [#allocation2], %s15
  %17 = vsyncmov [#allocation2]
  %s18 = vpop.sfrf %17
  %p19 = scmp.eq.s32.totalorder %s18, 0
  %p20 = pneg %p19
  %22 = shalt.err (%p20)

</llo_original>
